<compile_context>
chip_gen: v5e
topology: v5e:2x2
jax: 0.10.0
libtpu: 0.0.40
codegen_flags: <defaults>
</compile_context>

<pallas_src>
import functools

import jax
import jax.numpy as jnp
from jax.experimental import pallas as pl
from jax.experimental.pallas import tpu as pltpu


def _round_up(x, m):
    return ((x + m - 1) // m) * m


def _mlp_head_kernel(x_ref, w1_ref, b1_ref, w2_ref, b2_ref, o_ref):
    # Cast x f32 -> bf16 in-kernel (VPU work hidden under the DMA; avoids a
    # standalone XLA convert that would re-stream x through HBM).
    x_bf = x_ref[...].astype(jnp.bfloat16)
    # Hidden layer: x @ W1 (bf16 MXU, f32 accumulate) + b1, ReLU (f32 VPU).
    h = jnp.dot(x_bf, w1_ref[...], preferred_element_type=jnp.float32)
    h = jnp.maximum(h + b1_ref[...], 0.0)          # (TM, D) + (1, D) broadcast
    # Output layer: h @ W2 (bf16 MXU, f32 accumulate) + b2.
    o = jnp.dot(h.astype(w2_ref.dtype), w2_ref[...],
                preferred_element_type=jnp.float32)
    o_ref[...] = (o + b2_ref[...]).astype(o_ref.dtype)


@functools.partial(jax.jit, static_argnames=("block_m", "out_dtype"))
def mlp_projection_head(x, w1, b1, w2, b2, *, block_m=512,
                        out_dtype=jnp.float32):
    """x: [B, D] f32; w1: [D, D]; b1: [D]; w2: [D, O]; b2: [O] (pre-transposed).

    out_dtype: jnp.float32 (default, matches the PyTorch module) or
               jnp.bfloat16 (opt-in, ~40% less HBM traffic for D=128/O=256).
    """
    B, D = x.shape
    O = w2.shape[1]

    # Weights in bf16 for the MXU; biases stay f32 for the epilogue.
    w1_bf = w1.astype(jnp.bfloat16)
    w2_bf = w2.astype(jnp.bfloat16)
    b1_2d = b1.reshape(1, D).astype(jnp.float32)
    b2_2d = b2.reshape(1, O).astype(jnp.float32)

    # Batch tile: multiple of 16 (bf16 sublane packing), as large as block_m
    # allows but no larger than the (rounded-up) batch.
    bm = _round_up(min(block_m, max(B, 16)), 16)
    # v7x has 2 TensorCores: when the batch is big enough, cap the tile so the
    # "parallel" batch axis has at least 2 grid steps (no-op on v5e/v6e).
    if B >= 512:
        bm = min(bm, _round_up(-(-B // 2), 16))
    grid_m = pl.cdiv(B, bm)   # partial last block is masked by Pallas on store

    out_bytes = jnp.dtype(out_dtype).itemsize
    flops = 2 * B * D * (D + O)
    bytes_accessed = (B * D * 4              # x (f32, read directly)
                      + D * D * 2            # W1 (bf16)
                      + D * O * 2            # W2 (bf16)
                      + (D + O) * 4          # biases (f32)
                      + B * O * out_bytes)   # output

    out = pl.pallas_call(
        _mlp_head_kernel,
        out_shape=jax.ShapeDtypeStruct((B, O), out_dtype),
        grid_spec=pltpu.PrefetchScalarGridSpec(
            num_scalar_prefetch=0,
            grid=(grid_m,),
            in_specs=[
                # Batch tile of activations: double-buffered (default).
                pl.BlockSpec((bm, D), lambda i: (i, 0)),
                # Resident weights / biases: constant index_map, single buffer.
                pl.BlockSpec((D, D), lambda i: (0, 0),
                             pipeline_mode=pl.Buffered(1)),
                pl.BlockSpec((1, D), lambda i: (0, 0),
                             pipeline_mode=pl.Buffered(1)),
                pl.BlockSpec((D, O), lambda i: (0, 0),
                             pipeline_mode=pl.Buffered(1)),
                pl.BlockSpec((1, O), lambda i: (0, 0),
                             pipeline_mode=pl.Buffered(1)),
            ],
            out_specs=pl.BlockSpec((bm, O), lambda i: (i, 0)),
        ),
        compiler_params=pltpu.CompilerParams(
            dimension_semantics=("parallel",),
            vmem_limit_bytes=32 * 1024 * 1024,
        ),
        cost_estimate=pl.CostEstimate(
            flops=flops, transcendentals=0, bytes_accessed=bytes_accessed),
    )(x, w1_bf, b1_2d, w2_bf, b2_2d)

    return out


def _reference(x, w1, b1, w2, b2):
    h = jnp.maximum(x @ w1 + b1, 0.0)
    return h @ w2 + b2


if __name__ == "__main__":
    # Shapes consistent with the module: input_dim=128, output_dim=256.
    D, O = 128, 256
    key = jax.random.PRNGKey(0)
    kx, kw1, kb1, kw2, kb2, kx2, kx3 = jax.random.split(key, 7)

    bound = 1.0 / jnp.sqrt(D)
    # Weights stored already transposed: (in_features, out_features).
    w1 = jax.random.uniform(kw1, (D, D), minval=-bound, maxval=bound,
                            dtype=jnp.float32)
    b1 = jax.random.uniform(kb1, (D,), minval=-bound, maxval=bound,
                            dtype=jnp.float32)
    w2 = jax.random.uniform(kw2, (D, O), minval=-bound, maxval=bound,
                            dtype=jnp.float32)
    b2 = jax.random.uniform(kb2, (O,), minval=-bound, maxval=bound,
                            dtype=jnp.float32)

    # Test 1: tiny batch (single partial tile), default block_m, f32 output.
    x = jax.random.normal(kx, (8, D), dtype=jnp.float32)
    out = jax.block_until_ready(mlp_projection_head(x, w1, b1, w2, b2))
    ref = _reference(x, w1, b1, w2, b2)
    assert out.shape == (8, O) and out.dtype == jnp.float32, (out.shape, out.dtype)
    assert jnp.allclose(out, ref, atol=3e-2, rtol=3e-2), (
        float(jnp.max(jnp.abs(out - ref))))

    # Test 2: ragged batch with a multi-step grid + masked partial last block.
    x2 = jax.random.normal(kx2, (40, D), dtype=jnp.float32)
    out2 = jax.block_until_ready(
        mlp_projection_head(x2, w1, b1, w2, b2, block_m=16))
    ref2 = _reference(x2, w1, b1, w2, b2)
    assert out2.shape == (40, O), out2.shape
    assert jnp.allclose(out2, ref2, atol=3e-2, rtol=3e-2), (
        float(jnp.max(jnp.abs(out2 - ref2))))

    # Test 3: larger batch (>=2 grid steps for v7x megacore) + bf16 output.
    x3 = jax.random.normal(kx3, (600, D), dtype=jnp.float32)
    out3 = jax.block_until_ready(
        mlp_projection_head(x3, w1, b1, w2, b2, out_dtype=jnp.bfloat16))
    ref3 = _reference(x3, w1, b1, w2, b2)
    assert out3.shape == (600, O) and out3.dtype == jnp.bfloat16, (
        out3.shape, out3.dtype)
    assert jnp.allclose(out3.astype(jnp.float32), ref3, atol=5e-2, rtol=5e-2), (
        float(jnp.max(jnp.abs(out3.astype(jnp.float32) - ref3))))

    print("KERNEL_OK")
</pallas_src>

<mosaic_0001>
module attributes {stable_mosaic.version = 11 : i64} {
  func.func @_mlp_head_kernel(%arg0: i32, %arg1: memref<16x128xf32, #tpu.memory_space<vmem>>, %arg2: memref<128x128xbf16, #tpu.memory_space<vmem>>, %arg3: memref<1x128xf32, #tpu.memory_space<vmem>>, %arg4: memref<128x256xbf16, #tpu.memory_space<vmem>>, %arg5: memref<1x256xf32, #tpu.memory_space<vmem>>, %arg6: memref<16x256xf32, #tpu.memory_space<vmem>>) attributes {dimension_semantics = [#tpu.dimension_semantics<parallel>], iteration_bounds = array<i64: 1>, scalar_prefetch = 0 : i64, scratch_operands = 0 : i64, tpu.core_type = #tpu.core_type<tc>, window_params = [{transform_indices = @transform_0, window_bounds = array<i64: 16, 128>}, {pipeline_mode = #tpu.pipeline_mode<synchronous>, transform_indices = @transform_1, window_bounds = array<i64: 128, 128>}, {pipeline_mode = #tpu.pipeline_mode<synchronous>, transform_indices = @transform_2, window_bounds = array<i64: 1, 128>}, {pipeline_mode = #tpu.pipeline_mode<synchronous>, transform_indices = @transform_3, window_bounds = array<i64: 128, 256>}, {pipeline_mode = #tpu.pipeline_mode<synchronous>, transform_indices = @transform_4, window_bounds = array<i64: 1, 256>}, {transform_indices = @transform_5, window_bounds = array<i64: 16, 256>}]} {
    %c0 = arith.constant 0 : index
    %c0_0 = arith.constant 0 : index
    %0 = vector.load %arg1[%c0, %c0_0] : memref<16x128xf32, #tpu.memory_space<vmem>>, vector<16x128xf32>
    %1 = arith.truncf %0 : vector<16x128xf32> to vector<16x128xbf16>
    %c0_1 = arith.constant 0 : index
    %c0_2 = arith.constant 0 : index
    %2 = vector.load %arg2[%c0_1, %c0_2] : memref<128x128xbf16, #tpu.memory_space<vmem>>, vector<128x128xbf16>
    %cst = arith.constant dense<0.000000e+00> : vector<16x128xf32>
    %3 = tpu.matmul %1, %2, %cst {dimension_numbers = #tpu.dot_dimension_numbers<[1], [0], [0], [1], [0, 0, 1, 1], [], []>} : vector<16x128xbf16>, vector<128x128xbf16>, vector<16x128xf32> -> vector<16x128xf32>
    %c0_3 = arith.constant 0 : index
    %c0_4 = arith.constant 0 : index
    %4 = vector.load %arg3[%c0_3, %c0_4] : memref<1x128xf32, #tpu.memory_space<vmem>>, vector<1x128xf32>
    %5 = vector.broadcast %4 : vector<1x128xf32> to vector<16x128xf32>
    %6 = arith.addf %3, %5 : vector<16x128xf32>
    %cst_5 = arith.constant 0.000000e+00 : f32
    %7 = vector.broadcast %cst_5 : f32 to vector<16x128xf32>
    %8 = arith.maximumf %6, %7 : vector<16x128xf32>
    %9 = arith.truncf %8 : vector<16x128xf32> to vector<16x128xbf16>
    %c0_6 = arith.constant 0 : index
    %c0_7 = arith.constant 0 : index
    %10 = vector.load %arg4[%c0_6, %c0_7] : memref<128x256xbf16, #tpu.memory_space<vmem>>, vector<128x256xbf16>
    %cst_8 = arith.constant dense<0.000000e+00> : vector<16x256xf32>
    %11 = tpu.matmul %9, %10, %cst_8 {dimension_numbers = #tpu.dot_dimension_numbers<[1], [0], [0], [1], [0, 0, 1, 1], [], []>} : vector<16x128xbf16>, vector<128x256xbf16>, vector<16x256xf32> -> vector<16x256xf32>
    %c0_9 = arith.constant 0 : index
    %c0_10 = arith.constant 0 : index
    %12 = vector.load %arg5[%c0_9, %c0_10] : memref<1x256xf32, #tpu.memory_space<vmem>>, vector<1x256xf32>
    %13 = vector.broadcast %12 : vector<1x256xf32> to vector<16x256xf32>
    %14 = arith.addf %11, %13 : vector<16x256xf32>
    %c0_11 = arith.constant 0 : index
    %c0_12 = arith.constant 0 : index
    %15 = vector.load %arg6[%c0_11, %c0_12] : memref<16x256xf32, #tpu.memory_space<vmem>>, vector<16x256xf32>
    tpu.vector_store %arg6[%c0_11, %c0_12], %14 {strides = array<i32>} : memref<16x256xf32, #tpu.memory_space<vmem>>, vector<16x256xf32>,
    return
  }
  func.func @transform_0(%arg0: i32) -> (i32, i32) {
    %c0_i32 = arith.constant 0 : i32
    %c0_i32_0 = arith.constant 0 : i32
    return %arg0, %c0_i32 : i32, i32
  }
  func.func @transform_1(%arg0: i32) -> (i32, i32) {
    %c0_i32 = arith.constant 0 : i32
    %c0_i32_0 = arith.constant 0 : i32
    %c0_i32_1 = arith.constant 0 : i32
    return %c0_i32, %c0_i32_0 : i32, i32
  }
  func.func @transform_2(%arg0: i32) -> (i32, i32) {
    %c0_i32 = arith.constant 0 : i32
    %c0_i32_0 = arith.constant 0 : i32
    %c0_i32_1 = arith.constant 0 : i32
    return %c0_i32, %c0_i32_0 : i32, i32
  }
  func.func @transform_3(%arg0: i32) -> (i32, i32) {
    %c0_i32 = arith.constant 0 : i32
    %c0_i32_0 = arith.constant 0 : i32
    %c0_i32_1 = arith.constant 0 : i32
    return %c0_i32, %c0_i32_0 : i32, i32
  }
  func.func @transform_4(%arg0: i32) -> (i32, i32) {
    %c0_i32 = arith.constant 0 : i32
    %c0_i32_0 = arith.constant 0 : i32
    %c0_i32_1 = arith.constant 0 : i32
    return %c0_i32, %c0_i32_0 : i32, i32
  }
  func.func @transform_5(%arg0: i32) -> (i32, i32) {
    %c0_i32 = arith.constant 0 : i32
    %c0_i32_0 = arith.constant 0 : i32
    return %arg0, %c0_i32 : i32, i32
  }
}

</mosaic_0001>

<llo_original>
// kernel: mlp_projection_head.1
$region0: #{mlp_projection_head.1}
  #allocation0 [shape = 'u32[]', space=smem, size = 0x4, offset = 0x4, fixed_abs, tag = 'smem constant byte address 0x4 - core index']
  #allocation1 [shape = 'u32[72,128]{1,0:T(1,128)}', space=vmem, size = 0x9000, scoped, tag = 'internal scratch']
  %s0 = inlined_call_operand.vmem [shape: f32[8,128], index: 0, kind: input, shape index: {}]
  %s1 = inlined_call_operand.vmem [shape: bf16[128,128], index: 1, kind: input, shape index: {}]
  %s2 = inlined_call_operand.vmem [shape: f32[1,128], index: 2, kind: input, shape index: {}]
  %s3 = inlined_call_operand.vmem [shape: bf16[128,256], index: 3, kind: input, shape index: {}]
  %s4 = inlined_call_operand.vmem [shape: f32[1,256], index: 4, kind: input, shape index: {}]
  %s5 = inlined_call_operand.hbm [shape: f32[8,256], index: 5, kind: output, shape index: {}]
  %s6 = sld [smem:[#allocation0]]
  $region30: #{mlp_projection_head.1} parent=0
    _
  %s8 = ssub.s32 1, %s6
  %s9 = scalar_select 0, %s8, %s6
  $region1: #{mlp_projection_head.1} parent=0
    #allocation2 [shape = 'u8[16384]{0}', space=vmem, size = 0x4000, scoped, tag = 'output window, operand 0, single buffered']
    #allocation3 [shape = 's32[1]{0}', space=sflag, size = 0x4, scoped, tag = 'scoped memory for mlp_projection_head.1']
    %10 = vsyncpa [#allocation3], 0
    // Predicated region
    $region2: #{mlp_projection_head.1} parent=1 // pred_check
      _
    $region3: #{mlp_projection_head.1} parent=1 // pred_check_branch
      %12 = sbr.rel (0) target = $region5
    $region4: #{mlp_projection_head.1} parent=1 // pred_region
      _
    $region5: #{mlp_projection_head.1} parent=1 // pred_fallthru
      _
    // Predicated region
    $region6: #{mlp_projection_head.1} parent=1 // pred_check
      _
    $region7: #{mlp_projection_head.1} parent=1 // pred_check_branch
      %14 = sbr.rel (0) target = $region9
    $region8: #{mlp_projection_head.1} parent=1 // pred_region
      _
    $region9: #{mlp_projection_head.1} parent=1 // pred_fallthru
      _
    // Predicated region
    $region10: #{mlp_projection_head.1} parent=1 // pred_check
      _
    $region11: #{mlp_projection_head.1} parent=1 // pred_check_branch
      %16 = sbr.rel (0) target = $region13
    $region12: #{mlp_projection_head.1} parent=1 // pred_region
      _
    $region13: #{mlp_projection_head.1} parent=1 // pred_fallthru
      _
    // Predicated region
    $region14: #{mlp_projection_head.1} parent=1 // pred_check
      _
    $region15: #{mlp_projection_head.1} parent=1 // pred_check_branch
      %18 = sbr.rel (0) target = $region17
    $region16: #{mlp_projection_head.1} parent=1 // pred_region
      _
    $region17: #{mlp_projection_head.1} parent=1 // pred_fallthru
      _
    // Predicated region
    $region18: #{mlp_projection_head.1} parent=1 // pred_check
      _
    $region19: #{mlp_projection_head.1} parent=1 // pred_check_branch
      %20 = sbr.rel (0) target = $region21
    $region20: #{mlp_projection_head.1} parent=1 // pred_region
      _
    $region21: #{mlp_projection_head.1} parent=1 // pred_fallthru
      _
    %v21 = vld [vmem:[%s0] sm:$0xff]
    %v22 = vld [vmem:[%s0 + $0x8] sm:$0xff]
    %v23 = vpack.c.bf16 %v22, %v21
    %v24 = vld [vmem:[%s1] sm:$0xf]
    %v25 = vld [vmem:[%s1 + $0x4] sm:$0xf]
    %v26 = vld [vmem:[%s1 + $0x8] sm:$0xf]
    %v27 = vld [vmem:[%s1 + $0xc] sm:$0xf]
    %v28 = vld [vmem:[%s1 + $0x10] sm:$0xf]
    %v29 = vld [vmem:[%s1 + $0x14] sm:$0xf]
    %v30 = vld [vmem:[%s1 + $0x18] sm:$0xf]
    %v31 = vld [vmem:[%s1 + $0x1c] sm:$0xf]
    %v32 = vld [vmem:[%s1 + $0x20] sm:$0xf]
    %v33 = vld [vmem:[%s1 + $0x24] sm:$0xf]
    %v34 = vld [vmem:[%s1 + $0x28] sm:$0xf]
    %v35 = vld [vmem:[%s1 + $0x2c] sm:$0xf]
    %v36 = vld [vmem:[%s1 + $0x30] sm:$0xf]
    %v37 = vld [vmem:[%s1 + $0x34] sm:$0xf]
    %v38 = vld [vmem:[%s1 + $0x38] sm:$0xf]
    %v39 = vld [vmem:[%s1 + $0x3c] sm:$0xf]
    %v40 = vld [vmem:[%s2] sm:$0x1]
    %v42 = vperm.slane %v40, 0
    %v60 = vunpack.c.l.b16 %v24
    %v61 = vunpack.c.l.b16 %v25
    %v62 = vunpack.c.l.b16 %v26
    %v63 = vunpack.c.l.b16 %v27
    %v64 = vunpack.c.l.b16 %v28
    %v65 = vunpack.c.l.b16 %v29
    %v66 = vunpack.c.l.b16 %v30
    %v67 = vunpack.c.l.b16 %v31
    %v68 = vunpack.c.l.b16 %v32
    %v69 = vunpack.c.l.b16 %v33
    %v70 = vunpack.c.l.b16 %v34
    %v71 = vunpack.c.l.b16 %v35
    %v72 = vunpack.c.l.b16 %v36
    %v73 = vunpack.c.l.b16 %v37
    %v74 = vunpack.c.l.b16 %v38
    %v75 = vunpack.c.l.b16 %v39
    %v76 = vpack.c.b16 %v61, %v60
    %v77 = vpack.c.b16 %v63, %v62
    %v78 = vpack.c.b16 %v65, %v64
    %v79 = vpack.c.b16 %v67, %v66
    %v80 = vpack.c.b16 %v69, %v68
    %v81 = vpack.c.b16 %v71, %v70
    %v82 = vpack.c.b16 %v73, %v72
    %v83 = vpack.c.b16 %v75, %v74
    %92 = vmatpush.bf16.msra.mxu0 %v83
    %93 = vmatpush.bf16.msra.mxu0 %v82
    %94 = vmatpush.bf16.msra.mxu0 %v81
    %95 = vmatpush.bf16.msra.mxu0 %v80
    %96 = vmatpush.bf16.msra.mxu0 %v79
    %97 = vmatpush.bf16.msra.mxu0 %v78
    %98 = vmatpush.bf16.msra.mxu0 %v77
    %99 = vmatpush.bf16.msra.mxu0 %v76
    %100 = vmatmul.bf16.gmra.mxu0 %v23
    %v101 = vpop.f32.mrf.mxu0
    %v102 = vadd.f32 %v42, %v101
    %v103 = vpop.f32.mrf.mxu0
    %v104 = vadd.f32 %v42, %v103
    %105 = vdwg.mxu0
    %v106 = vmax.f32 %v102, 0.0
    %v107 = vmax.f32 %v104, 0.0
    %v108 = vpack.c.bf16 %v107, %v106
    %v109 = vld [vmem:[%s3] sm:$0xff]
    %v110 = vld [vmem:[%s3 + $0x8] sm:$0xff]
    %v111 = vld [vmem:[%s3 + $0x10] sm:$0xff]
    %v112 = vld [vmem:[%s3 + $0x18] sm:$0xff]
    %v113 = vld [vmem:[%s3 + $0x20] sm:$0xff]
    %v114 = vld [vmem:[%s3 + $0x28] sm:$0xff]
    %v115 = vld [vmem:[%s3 + $0x30] sm:$0xff]
    %v116 = vld [vmem:[%s3 + $0x38] sm:$0xff]
    %v117 = vld [vmem:[%s3 + $0x40] sm:$0xff]
    %v118 = vld [vmem:[%s3 + $0x48] sm:$0xff]
    %v119 = vld [vmem:[%s3 + $0x50] sm:$0xff]
    %v120 = vld [vmem:[%s3 + $0x58] sm:$0xff]
    %v121 = vld [vmem:[%s3 + $0x60] sm:$0xff]
    %v122 = vld [vmem:[%s3 + $0x68] sm:$0xff]
    %v123 = vld [vmem:[%s3 + $0x70] sm:$0xff]
    %v124 = vld [vmem:[%s3 + $0x78] sm:$0xff]
    %v125 = vld [vmem:[%s4] sm:$0x3]
    %v127 = vperm.slane %v125, 0
    %v128 = vperm.slane %v125, 1
    %v147 = vunpack.c.l.b16 %v109
    %v148 = vunpack.c.h.b16 %v109
    %v149 = vunpack.c.l.b16 %v110
    %v150 = vunpack.c.h.b16 %v110
    %v151 = vunpack.c.l.b16 %v111
    %v152 = vunpack.c.h.b16 %v111
    %v153 = vunpack.c.l.b16 %v112
    %v154 = vunpack.c.h.b16 %v112
    %v155 = vunpack.c.l.b16 %v113
    %v156 = vunpack.c.h.b16 %v113
    %v157 = vunpack.c.l.b16 %v114
    %v158 = vunpack.c.h.b16 %v114
    %v159 = vunpack.c.l.b16 %v115
    %v160 = vunpack.c.h.b16 %v115
    %v161 = vunpack.c.l.b16 %v116
    %v162 = vunpack.c.h.b16 %v116
    %v163 = vunpack.c.l.b16 %v117
    %v164 = vunpack.c.h.b16 %v117
    %v165 = vunpack.c.l.b16 %v118
    %v166 = vunpack.c.h.b16 %v118
    %v167 = vunpack.c.l.b16 %v119
    %v168 = vunpack.c.h.b16 %v119
    %v169 = vunpack.c.l.b16 %v120
    %v170 = vunpack.c.h.b16 %v120
    %v171 = vunpack.c.l.b16 %v121
    %v172 = vunpack.c.h.b16 %v121
    %v173 = vunpack.c.l.b16 %v122
    %v174 = vunpack.c.h.b16 %v122
    %v175 = vunpack.c.l.b16 %v123
    %v176 = vunpack.c.h.b16 %v123
    %v177 = vunpack.c.l.b16 %v124
    %v178 = vunpack.c.h.b16 %v124
    %v179 = vpack.c.b16 %v149, %v147
    %v180 = vpack.c.b16 %v150, %v148
    %v181 = vpack.c.b16 %v153, %v151
    %v182 = vpack.c.b16 %v154, %v152
    %v183 = vpack.c.b16 %v157, %v155
    %v184 = vpack.c.b16 %v158, %v156
    %v185 = vpack.c.b16 %v161, %v159
    %v186 = vpack.c.b16 %v162, %v160
    %v187 = vpack.c.b16 %v165, %v163
    %v188 = vpack.c.b16 %v166, %v164
    %v189 = vpack.c.b16 %v169, %v167
    %v190 = vpack.c.b16 %v170, %v168
    %v191 = vpack.c.b16 %v173, %v171
    %v192 = vpack.c.b16 %v174, %v172
    %v193 = vpack.c.b16 %v177, %v175
    %v194 = vpack.c.b16 %v178, %v176
    %211 = vmatpush.bf16.msra.mxu0 %v193
    %212 = vmatpush.bf16.msra.mxu0 %v191
    %213 = vmatpush.bf16.msra.mxu0 %v189
    %214 = vmatpush.bf16.msra.mxu0 %v187
    %215 = vmatpush.bf16.msra.mxu0 %v185
    %216 = vmatpush.bf16.msra.mxu0 %v183
    %217 = vmatpush.bf16.msra.mxu0 %v181
    %218 = vmatpush.bf16.msra.mxu0 %v179
    %219 = vmatmul.bf16.gmra.mxu0 %v108
    %v220 = vpop.f32.mrf.mxu0
    %v221 = vadd.f32 %v127, %v220
    %v222 = vpop.f32.mrf.mxu0
    %v223 = vadd.f32 %v127, %v222
    %224 = vdwg.mxu0
    %225 = vmatpush.bf16.msra.mxu0 %v194
    %226 = vmatpush.bf16.msra.mxu0 %v192
    %227 = vmatpush.bf16.msra.mxu0 %v190
    %228 = vmatpush.bf16.msra.mxu0 %v188
    %229 = vmatpush.bf16.msra.mxu0 %v186
    %230 = vmatpush.bf16.msra.mxu0 %v184
    %231 = vmatpush.bf16.msra.mxu0 %v182
    %232 = vmatpush.bf16.msra.mxu0 %v180
    %233 = vmatmul.bf16.gmra.mxu0 %v108
    %v234 = vpop.f32.mrf.mxu0
    %v235 = vadd.f32 %v128, %v234
    %v236 = vpop.f32.mrf.mxu0
    %v237 = vadd.f32 %v128, %v236
    %238 = vdwg.mxu0
    %239 = vst [vmem:[#allocation2] sm:$0xff] %v221
    %240 = vst [vmem:[#allocation2 + $0x8] sm:$0xff] %v235
    %241 = vst [vmem:[#allocation2 + $0x10] sm:$0xff] %v223
    %242 = vst [vmem:[#allocation2 + $0x18] sm:$0xff] %v237
    // Predicated region
    $region22: #{mlp_projection_head.1} parent=1 // pred_check
      _
    $region23: #{mlp_projection_head.1} parent=1 // pred_check_branch
      %244 = sbr.rel (0) target = $region25
    $region24: #{mlp_projection_head.1} parent=1 // pred_region
      %246 = vsyncadd [#allocation3], 256
      %s247 = sshll.u32 [#allocation2], 4
      %s248 = int_to_ptr.vmem [resolvable:$true] %s247
      %s249 = sshll.u32 %s5, 4
      %s250 = int_to_ptr.hbm [resolvable:$true] %s249
      %255 = dma.vmem_to_hbm [thread:$0]  %s248, 256, %s250, [#allocation3], 256, 256, 16
    $region25: #{mlp_projection_head.1} parent=1 // pred_fallthru
      _
    // Predicated region
    $region26: #{mlp_projection_head.1} parent=1 // pred_check
      _
    $region27: #{mlp_projection_head.1} parent=1 // pred_check_branch
      %257 = sbr.rel (0) target = $region29
    $region28: #{mlp_projection_head.1} parent=1 // pred_region
      %259 = dma.done [#allocation3], 512
    $region29: #{mlp_projection_head.1} parent=1 // pred_fallthru
      _
    %260 = vsyncpa [#allocation3], 1

</llo_original>
